<compile_context>
chip_gen: v6e
topology: v6e:2x2x1
jax: 0.10.0
libtpu: 0.0.40
codegen_flags: <defaults>
</compile_context>

<pallas_src>
import functools
import math

import jax
import jax.numpy as jnp
from jax.experimental import pallas as pl
from jax.experimental.pallas import tpu as pltpu


def _round_up(x: int, m: int) -> int:
    return ((x + m - 1) // m) * m


def _vmem_budget_bytes() -> int:
    """~75% of physical VMEM (96 MiB on 128 MiB parts, 48 MiB on v7x's 64 MiB)."""
    try:
        phys = int(pltpu.get_tpu_info().vmem_capacity_bytes)
    except Exception:
        phys = 64 * 1024 * 1024   # conservative fallback (v7x per-TensorCore size)
    return (phys * 3) // 4


# ----------------------------------------------------------------------------
# Kernels
# ----------------------------------------------------------------------------
def ffn_kernel_resident(x_ref, gamma_ref, beta_ref, w1_ref, b1_ref, w2_ref, b2_ref,
                        o_ref, *, eps: float):
    """Grid = (token_tiles,). Weights are VMEM-resident (constant index maps)."""
    x = x_ref[...].astype(jnp.float32)
    mean = jnp.mean(x, axis=-1, keepdims=True)
    centered = x - mean
    var = jnp.mean(centered * centered, axis=-1, keepdims=True)   # biased, like torch
    inv = jax.lax.rsqrt(var + eps)
    normed = centered * inv * gamma_ref[...].astype(jnp.float32) \
             + beta_ref[...].astype(jnp.float32)

    h = jnp.dot(normed.astype(w1_ref.dtype), w1_ref[...],
                preferred_element_type=jnp.float32)
    h = h + b1_ref[...].astype(jnp.float32)
    # tanh-approx GELU -> EUP slot instead of a long VALU erf polynomial.
    h = jax.nn.gelu(h, approximate=True)
    # TODO(synk): bf16 bias+GELU path on v6e/v7x (bf16 VPU/EUP) to halve VALU work.

    out = jnp.dot(h.astype(w2_ref.dtype), w2_ref[...],
                  preferred_element_type=jnp.float32)
    out = out + b2_ref[...].astype(jnp.float32) + x       # dropout(p=0) == identity
    o_ref[...] = out.astype(o_ref.dtype)


def ffn_kernel_kblocked(x_ref, gamma_ref, beta_ref, w1_ref, b1_ref, w2_ref, b2_ref,
                        o_ref, *scratch, eps: float, acc_in_out: bool):
    """Grid = (token_tiles, I_blocks); I is the reduction ('arbitrary') axis."""
    if acc_in_out:
        (normed_ref,) = scratch      # output dtype is f32: accumulate into o_ref
        acc_ref = o_ref
    else:
        acc_ref, normed_ref = scratch

    k = pl.program_id(1)

    # First k step: LayerNorm (f32 stats), cache normed as bf16, zero accumulator.
    @pl.when(k == 0)
    def _():
        x = x_ref[...].astype(jnp.float32)
        mean = jnp.mean(x, axis=-1, keepdims=True)
        centered = x - mean
        var = jnp.mean(centered * centered, axis=-1, keepdims=True)
        inv = jax.lax.rsqrt(var + eps)
        normed = centered * inv * gamma_ref[...].astype(jnp.float32) \
                 + beta_ref[...].astype(jnp.float32)
        normed_ref[...] = normed.astype(normed_ref.dtype)
        acc_ref[...] = jnp.zeros_like(acc_ref)

    # dense_i2h slab (bf16 x bf16 -> f32 acc on MXU) + tanh GELU.
    h = jnp.dot(normed_ref[...], w1_ref[...], preferred_element_type=jnp.float32)
    h = h + b1_ref[...].astype(jnp.float32)
    h = jax.nn.gelu(h, approximate=True)

    # dense_h2o partial product, accumulated across I blocks.
    acc_ref[...] += jnp.dot(h.astype(w2_ref.dtype), w2_ref[...],
                            preferred_element_type=jnp.float32)

    # Last k step: bias + residual (dropout p=0 -> identity).
    @pl.when(k == pl.num_programs(1) - 1)
    def _():
        out = acc_ref[...] + b2_ref[...].astype(jnp.float32) \
              + x_ref[...].astype(jnp.float32)
        o_ref[...] = out.astype(o_ref.dtype)


# ----------------------------------------------------------------------------
# Wrapper
# ----------------------------------------------------------------------------
def reference_ffn(x, gamma, beta, w1, b1, w2, b2, *, eps=1e-12,
                  compute_dtype=jnp.bfloat16, tm=None, tk=None,
                  force_kblocked=False):
    """x: [B, S, H]; weights stored transposed vs nn.Linear (w1: [H,I], w2: [I,H])."""
    B, S, H = x.shape
    I = w1.shape[1]
    N = B * S
    xb = jnp.dtype(x.dtype).itemsize
    ob = xb

    budget = _vmem_budget_bytes()
    headroom = (budget * 9) // 10
    acc_in_out = (x.dtype == jnp.float32)

    # ---- row-tile candidates (multiples of 128 for full MXU M occupancy) ----
    if tm is not None:
        tm_cands = [tm]
    elif N >= 128:
        cap = _round_up(N, 128)
        tm_cands = [t for t in (1024, 768, 512, 384, 256, 128) if t <= cap] or [128]
    else:
        tm_cands = [_round_up(max(N, 8), 8)]

    def resident_bytes(t):
        b = 2 * t * H * xb + 2 * t * H * ob            # x / out tiles (double-buffered)
        b += 2 * H * I * 2 + 2 * I * H * 2             # w1 / w2 (bf16, counted x2)
        b += 2 * I * 4 + 6 * H * 4                     # biases / LN params
        b += t * I * (4 + 2) + t * H * 4               # live h (f32+bf16) and normed temps
        return b

    def kblocked_bytes(t, s):
        b = 2 * t * H * xb + 2 * t * H * ob
        b += 2 * H * s * 2 + 2 * s * H * 2             # w1 / w2 slabs (bf16)
        b += 2 * s * 4 + 6 * H * 4
        b += t * H * 2                                 # cached LN output (bf16)
        if not acc_in_out:
            b += t * H * 4                             # f32 accumulator scratch
        b += t * s * (4 + 2)                           # live h temporaries
        return b

    use_resident = (not force_kblocked) and (2 * H * I * 2 <= budget // 3)

    tm_eff = None
    tk_eff = None
    if use_resident:
        for t in tm_cands:
            if resident_bytes(t) <= headroom:
                tm_eff = t
                break
        if tm_eff is None:
            use_resident = False

    if not use_resident:
        if tk is not None:
            tk_cands = [tk]
        else:
            cap_k = _round_up(I, 128)
            tk_cands = [t for t in (1024, 768, 512, 384, 256, 128) if t <= cap_k] or [128]
        chosen = None
        for t in tm_cands:                 # prefer the largest row tile ...
            for s in tk_cands:             # ... then the largest I block
                if kblocked_bytes(t, s) <= headroom:
                    chosen = (t, s)
                    break
            if chosen is not None:
                break
        if chosen is None:
            chosen = (tm_cands[-1], tk_cands[-1])
        tm_eff, tk_eff = chosen

    n_pad = _round_up(N, tm_eff)
    x2 = x.reshape(N, H)
    if n_pad != N:
        # Padded rows hit rsqrt(0 + eps) -> large but finite values; they are
        # sliced off before returning (intentional, not a NaN path).
        x2 = jnp.pad(x2, ((0, n_pad - N), (0, 0)))

    w1c = w1.astype(compute_dtype)
    w2c = w2.astype(compute_dtype)

    params = pltpu.CompilerParams(
        dimension_semantics=("parallel",) if use_resident else ("parallel", "arbitrary"),
        vmem_limit_bytes=budget,
    )

    if use_resident:
        kernel = functools.partial(ffn_kernel_resident, eps=eps)
        out2 = pl.pallas_call(
            kernel,
            out_shape=jax.ShapeDtypeStruct((n_pad, H), x.dtype),
            grid_spec=pltpu.PrefetchScalarGridSpec(
                num_scalar_prefetch=0,
                grid=(n_pad // tm_eff,),
                in_specs=[
                    pl.BlockSpec((tm_eff, H), lambda i: (i, 0)),   # x tile
                    pl.BlockSpec((1, H), lambda i: (0, 0)),        # ln gamma
                    pl.BlockSpec((1, H), lambda i: (0, 0)),        # ln beta
                    pl.BlockSpec((H, I), lambda i: (0, 0)),        # w1 (resident)
                    pl.BlockSpec((1, I), lambda i: (0, 0)),        # b1
                    pl.BlockSpec((I, H), lambda i: (0, 0)),        # w2 (resident)
                    pl.BlockSpec((1, H), lambda i: (0, 0)),        # b2
                ],
                out_specs=pl.BlockSpec((tm_eff, H), lambda i: (i, 0)),
            ),
            compiler_params=params,
        )(x2, gamma, beta, w1c, b1, w2c, b2)
        return out2[:N].reshape(B, S, H)

    # ---- K-blocked path: pad I to a multiple of tk (zero pad -> exact) ------
    i_pad = _round_up(I, tk_eff)
    if i_pad != I:
        w1c = jnp.pad(w1c, ((0, 0), (0, i_pad - I)))
        b1p = jnp.pad(b1, ((0, 0), (0, i_pad - I)))
        w2c = jnp.pad(w2c, ((0, i_pad - I), (0, 0)))   # zero rows -> zero contribution
    else:
        b1p = b1
    nk = i_pad // tk_eff

    def k_index(i, k):
        # Serpentine over the reduction axis: odd token tiles walk k backwards so
        # the boundary weight slab is reused between consecutive token tiles.
        return k + (i % 2) * (nk - 1 - 2 * k)

    kernel = functools.partial(ffn_kernel_kblocked, eps=eps, acc_in_out=acc_in_out)
    scratch = [pltpu.VMEM((tm_eff, H), compute_dtype)]             # cached LN output
    if not acc_in_out:
        scratch = [pltpu.VMEM((tm_eff, H), jnp.float32)] + scratch  # f32 accumulator

    out2 = pl.pallas_call(
        kernel,
        out_shape=jax.ShapeDtypeStruct((n_pad, H), x.dtype),
        grid_spec=pltpu.PrefetchScalarGridSpec(
            num_scalar_prefetch=0,
            grid=(n_pad // tm_eff, nk),
            in_specs=[
                pl.BlockSpec((tm_eff, H), lambda i, k: (i, 0)),             # x tile
                pl.BlockSpec((1, H), lambda i, k: (0, 0)),                  # ln gamma
                pl.BlockSpec((1, H), lambda i, k: (0, 0)),                  # ln beta
                pl.BlockSpec((H, tk_eff), lambda i, k: (0, k_index(i, k))), # w1 slab
                pl.BlockSpec((1, tk_eff), lambda i, k: (0, k_index(i, k))), # b1 slab
                pl.BlockSpec((tk_eff, H), lambda i, k: (k_index(i, k), 0)), # w2 slab
                pl.BlockSpec((1, H), lambda i, k: (0, 0)),                  # b2
            ],
            out_specs=pl.BlockSpec((tm_eff, H), lambda i, k: (i, 0)),
            scratch_shapes=scratch,
        ),
        compiler_params=params,
    )(x2, gamma, beta, w1c, b1p, w2c, b2)
    return out2[:N].reshape(B, S, H)


# ----------------------------------------------------------------------------
# Pure-JAX references
# ----------------------------------------------------------------------------
def reference_ffn_jax(x, gamma, beta, w1, b1, w2, b2, eps=1e-12,
                      compute_dtype=jnp.float32, approximate_gelu=False):
    xf = x.astype(jnp.float32)
    mean = jnp.mean(xf, axis=-1, keepdims=True)
    var = jnp.mean((xf - mean) ** 2, axis=-1, keepdims=True)
    normed = (xf - mean) * jax.lax.rsqrt(var + eps) * gamma[0] + beta[0]
    h = jnp.dot(normed.astype(compute_dtype), w1.astype(compute_dtype),
                preferred_element_type=jnp.float32) + b1[0]
    if approximate_gelu:
        h = jax.nn.gelu(h, approximate=True)
    else:
        h = 0.5 * h * (1.0 + jax.lax.erf(h / math.sqrt(2.0)))
    out = jnp.dot(h.astype(compute_dtype), w2.astype(compute_dtype),
                  preferred_element_type=jnp.float32) + b2[0]
    return (out + xf).astype(x.dtype)


# ----------------------------------------------------------------------------
# Self-test
# ----------------------------------------------------------------------------
if __name__ == "__main__":
    def make_params(key, H, I):
        k = jax.random.split(key, 7)
        lim1 = 1.0 / math.sqrt(H)
        lim2 = 1.0 / math.sqrt(I)
        w1 = jax.random.uniform(k[1], (H, I), jnp.float32, -lim1, lim1)
        b1 = jax.random.uniform(k[2], (1, I), jnp.float32, -lim1, lim1)
        w2 = jax.random.uniform(k[3], (I, H), jnp.float32, -lim2, lim2)
        b2 = jax.random.uniform(k[4], (1, H), jnp.float32, -lim2, lim2)
        gamma = 1.0 + 0.1 * jax.random.normal(k[5], (1, H), jnp.float32)
        beta = 0.1 * jax.random.normal(k[6], (1, H), jnp.float32)
        return k[0], (gamma, beta, w1, b1, w2, b2)

    def check(out, x, params):
        assert not bool(jnp.any(jnp.isnan(out)))
        ref_mimic = reference_ffn_jax(x, *params, compute_dtype=jnp.bfloat16,
                                      approximate_gelu=True)
        ref_f32 = reference_ffn_jax(x, *params, compute_dtype=jnp.float32,
                                    approximate_gelu=False)
        assert jnp.allclose(out, ref_mimic, atol=2e-2, rtol=2e-2), \
            "mismatch vs bf16/tanh-mimicking JAX ref"
        assert jnp.allclose(out, ref_f32, atol=6e-2, rtol=6e-2), \
            "mismatch vs f32/erf JAX ref"

    # --- Test 1: small FFN -> resident-weights path (single grid axis) ------
    B, S, H, I = 2, 8, 32, 128   # batch, seq, hidden_size, intermediate_size
    xkey, params = make_params(jax.random.PRNGKey(0), H, I)
    x = jax.random.normal(xkey, (B, S, H), dtype=jnp.float32)
    out = jax.block_until_ready(reference_ffn(x, *params))
    assert out.shape == (B, S, H)
    check(out, x, params)

    # --- Test 2: force the K-blocked / serpentine path (acc directly in o_ref)
    B2, S2, H2, I2 = 2, 128, 128, 512
    xkey2, params2 = make_params(jax.random.PRNGKey(1), H2, I2)
    x2 = jax.random.normal(xkey2, (B2, S2, H2), dtype=jnp.float32)
    out2 = jax.block_until_ready(
        reference_ffn(x2, *params2, tm=128, tk=256, force_kblocked=True))
    assert out2.shape == (B2, S2, H2)
    check(out2, x2, params2)

    print("KERNEL_OK")
</pallas_src>

<mosaic_0001>
module attributes {stable_mosaic.version = 11 : i64} {
  func.func @ffn_kernel_resident(%arg0: i32, %arg1: memref<16x32xf32, #tpu.memory_space<vmem>>, %arg2: memref<1x32xf32, #tpu.memory_space<vmem>>, %arg3: memref<1x32xf32, #tpu.memory_space<vmem>>, %arg4: memref<32x128xbf16, #tpu.memory_space<vmem>>, %arg5: memref<1x128xf32, #tpu.memory_space<vmem>>, %arg6: memref<128x32xbf16, #tpu.memory_space<vmem>>, %arg7: memref<1x32xf32, #tpu.memory_space<vmem>>, %arg8: memref<16x32xf32, #tpu.memory_space<vmem>>) attributes {dimension_semantics = [#tpu.dimension_semantics<parallel>], iteration_bounds = array<i64: 1>, scalar_prefetch = 0 : i64, scratch_operands = 0 : i64, tpu.core_type = #tpu.core_type<tc>, window_params = [{transform_indices = @transform_0, window_bounds = array<i64: 16, 32>}, {pipeline_mode = #tpu.pipeline_mode<synchronous>, transform_indices = @transform_1, window_bounds = array<i64: 1, 32>}, {pipeline_mode = #tpu.pipeline_mode<synchronous>, transform_indices = @transform_2, window_bounds = array<i64: 1, 32>}, {pipeline_mode = #tpu.pipeline_mode<synchronous>, transform_indices = @transform_3, window_bounds = array<i64: 32, 128>}, {pipeline_mode = #tpu.pipeline_mode<synchronous>, transform_indices = @transform_4, window_bounds = array<i64: 1, 128>}, {pipeline_mode = #tpu.pipeline_mode<synchronous>, transform_indices = @transform_5, window_bounds = array<i64: 128, 32>}, {pipeline_mode = #tpu.pipeline_mode<synchronous>, transform_indices = @transform_6, window_bounds = array<i64: 1, 32>}, {transform_indices = @transform_7, window_bounds = array<i64: 16, 32>}]} {
    %c0 = arith.constant 0 : index
    %c0_0 = arith.constant 0 : index
    %0 = vector.load %arg1[%c0, %c0_0] : memref<16x32xf32, #tpu.memory_space<vmem>>, vector<16x32xf32>
    %cst = arith.constant dense<0.000000e+00> : vector<16xf32>
    %1 = vector.multi_reduction <add>, %0, %cst [1] : vector<16x32xf32> to vector<16xf32>
    %2 = vector.shape_cast %1 : vector<16xf32> to vector<16x1xf32>
    %cst_1 = arith.constant 3.200000e+01 : f32
    %3 = vector.broadcast %cst_1 : f32 to vector<16x1xf32>
    %4 = arith.divf %2, %3 : vector<16x1xf32>
    %5 = vector.broadcast %4 : vector<16x1xf32> to vector<16x32xf32>
    %6 = arith.subf %0, %5 : vector<16x32xf32>
    %7 = arith.mulf %6, %6 : vector<16x32xf32>
    %cst_2 = arith.constant dense<0.000000e+00> : vector<16xf32>
    %8 = vector.multi_reduction <add>, %7, %cst_2 [1] : vector<16x32xf32> to vector<16xf32>
    %9 = vector.shape_cast %8 : vector<16xf32> to vector<16x1xf32>
    %cst_3 = arith.constant 3.200000e+01 : f32
    %10 = vector.broadcast %cst_3 : f32 to vector<16x1xf32>
    %11 = arith.divf %9, %10 : vector<16x1xf32>
    %cst_4 = arith.constant 9.99999996E-13 : f32
    %12 = vector.broadcast %cst_4 : f32 to vector<16x1xf32>
    %13 = arith.addf %11, %12 : vector<16x1xf32>
    %14 = math.rsqrt %13 : vector<16x1xf32>
    %15 = vector.broadcast %14 : vector<16x1xf32> to vector<16x32xf32>
    %16 = arith.mulf %6, %15 : vector<16x32xf32>
    %c0_5 = arith.constant 0 : index
    %c0_6 = arith.constant 0 : index
    %17 = vector.load %arg2[%c0_5, %c0_6] : memref<1x32xf32, #tpu.memory_space<vmem>>, vector<1x32xf32>
    %18 = vector.broadcast %17 : vector<1x32xf32> to vector<16x32xf32>
    %19 = arith.mulf %16, %18 : vector<16x32xf32>
    %c0_7 = arith.constant 0 : index
    %c0_8 = arith.constant 0 : index
    %20 = vector.load %arg3[%c0_7, %c0_8] : memref<1x32xf32, #tpu.memory_space<vmem>>, vector<1x32xf32>
    %21 = vector.broadcast %20 : vector<1x32xf32> to vector<16x32xf32>
    %22 = arith.addf %19, %21 : vector<16x32xf32>
    %23 = arith.truncf %22 : vector<16x32xf32> to vector<16x32xbf16>
    %c0_9 = arith.constant 0 : index
    %c0_10 = arith.constant 0 : index
    %24 = vector.load %arg4[%c0_9, %c0_10] : memref<32x128xbf16, #tpu.memory_space<vmem>>, vector<32x128xbf16>
    %cst_11 = arith.constant dense<0.000000e+00> : vector<16x128xf32>
    %25 = tpu.matmul %23, %24, %cst_11 {dimension_numbers = #tpu.dot_dimension_numbers<[1], [0], [0], [1], [0, 0, 1, 1], [], []>} : vector<16x32xbf16>, vector<32x128xbf16>, vector<16x128xf32> -> vector<16x128xf32>
    %c0_12 = arith.constant 0 : index
    %c0_13 = arith.constant 0 : index
    %26 = vector.load %arg5[%c0_12, %c0_13] : memref<1x128xf32, #tpu.memory_space<vmem>>, vector<1x128xf32>
    %27 = vector.broadcast %26 : vector<1x128xf32> to vector<16x128xf32>
    %28 = arith.addf %25, %27 : vector<16x128xf32>
    %29 = arith.mulf %28, %28 : vector<16x128xf32>
    %30 = arith.mulf %28, %29 : vector<16x128xf32>
    %cst_14 = arith.constant 4.471500e-02 : f32
    %31 = vector.broadcast %cst_14 : f32 to vector<16x128xf32>
    %32 = arith.mulf %31, %30 : vector<16x128xf32>
    %33 = arith.addf %28, %32 : vector<16x128xf32>
    %cst_15 = arith.constant 0.797884583 : f32
    %34 = vector.broadcast %cst_15 : f32 to vector<16x128xf32>
    %35 = arith.mulf %34, %33 : vector<16x128xf32>
    %36 = math.tanh %35 : vector<16x128xf32>
    %cst_16 = arith.constant 1.000000e+00 : f32
    %37 = vector.broadcast %cst_16 : f32 to vector<16x128xf32>
    %38 = arith.addf %37, %36 : vector<16x128xf32>
    %cst_17 = arith.constant 5.000000e-01 : f32
    %39 = vector.broadcast %cst_17 : f32 to vector<16x128xf32>
    %40 = arith.mulf %39, %38 : vector<16x128xf32>
    %41 = arith.mulf %28, %40 : vector<16x128xf32>
    %42 = arith.truncf %41 : vector<16x128xf32> to vector<16x128xbf16>
    %c0_18 = arith.constant 0 : index
    %c0_19 = arith.constant 0 : index
    %43 = vector.load %arg6[%c0_18, %c0_19] : memref<128x32xbf16, #tpu.memory_space<vmem>>, vector<128x32xbf16>
    %cst_20 = arith.constant dense<0.000000e+00> : vector<16x32xf32>
    %44 = tpu.matmul %42, %43, %cst_20 {dimension_numbers = #tpu.dot_dimension_numbers<[1], [0], [0], [1], [0, 0, 1, 1], [], []>} : vector<16x128xbf16>, vector<128x32xbf16>, vector<16x32xf32> -> vector<16x32xf32>
    %c0_21 = arith.constant 0 : index
    %c0_22 = arith.constant 0 : index
    %45 = vector.load %arg7[%c0_21, %c0_22] : memref<1x32xf32, #tpu.memory_space<vmem>>, vector<1x32xf32>
    %46 = vector.broadcast %45 : vector<1x32xf32> to vector<16x32xf32>
    %47 = arith.addf %44, %46 : vector<16x32xf32>
    %48 = arith.addf %47, %0 : vector<16x32xf32>
    %c0_23 = arith.constant 0 : index
    %c0_24 = arith.constant 0 : index
    %49 = vector.load %arg8[%c0_23, %c0_24] : memref<16x32xf32, #tpu.memory_space<vmem>>, vector<16x32xf32>
    tpu.vector_store %arg8[%c0_23, %c0_24], %48 {strides = array<i32>} : memref<16x32xf32, #tpu.memory_space<vmem>>, vector<16x32xf32>,
    return
  }
  func.func @transform_0(%arg0: i32) -> (i32, i32) {
    %c0_i32 = arith.constant 0 : i32
    %c0_i32_0 = arith.constant 0 : i32
    return %arg0, %c0_i32 : i32, i32
  }
  func.func @transform_1(%arg0: i32) -> (i32, i32) {
    %c0_i32 = arith.constant 0 : i32
    %c0_i32_0 = arith.constant 0 : i32
    %c0_i32_1 = arith.constant 0 : i32
    return %c0_i32, %c0_i32_0 : i32, i32
  }
  func.func @transform_2(%arg0: i32) -> (i32, i32) {
    %c0_i32 = arith.constant 0 : i32
    %c0_i32_0 = arith.constant 0 : i32
    %c0_i32_1 = arith.constant 0 : i32
    return %c0_i32, %c0_i32_0 : i32, i32
  }
  func.func @transform_3(%arg0: i32) -> (i32, i32) {
    %c0_i32 = arith.constant 0 : i32
    %c0_i32_0 = arith.constant 0 : i32
    %c0_i32_1 = arith.constant 0 : i32
    return %c0_i32, %c0_i32_0 : i32, i32
  }
  func.func @transform_4(%arg0: i32) -> (i32, i32) {
    %c0_i32 = arith.constant 0 : i32
    %c0_i32_0 = arith.constant 0 : i32
    %c0_i32_1 = arith.constant 0 : i32
    return %c0_i32, %c0_i32_0 : i32, i32
  }
  func.func @transform_5(%arg0: i32) -> (i32, i32) {
    %c0_i32 = arith.constant 0 : i32
    %c0_i32_0 = arith.constant 0 : i32
    %c0_i32_1 = arith.constant 0 : i32
    return %c0_i32, %c0_i32_0 : i32, i32
  }
  func.func @transform_6(%arg0: i32) -> (i32, i32) {
    %c0_i32 = arith.constant 0 : i32
    %c0_i32_0 = arith.constant 0 : i32
    %c0_i32_1 = arith.constant 0 : i32
    return %c0_i32, %c0_i32_0 : i32, i32
  }
  func.func @transform_7(%arg0: i32) -> (i32, i32) {
    %c0_i32 = arith.constant 0 : i32
    %c0_i32_0 = arith.constant 0 : i32
    return %arg0, %c0_i32 : i32, i32
  }
}

</mosaic_0001>

<llo_original>
// kernel: tpu_custom_call.1
$region0: #{tpu_custom_call.1}
  #allocation0 [shape = 'u32[]', space=smem, size = 0x4, offset = 0x4, fixed_abs, tag = 'smem constant byte address 0x4 - core index']
  #allocation1 [shape = 'u32[144,128]{1,0:T(1,128)}', space=vmem, size = 0x12000, scoped, tag = 'internal scratch']
  %s0 = inlined_call_operand.vmem [shape: f32[16,32], index: 0, kind: input, shape index: {}]
  %s1 = inlined_call_operand.vmem [shape: f32[1,32], index: 1, kind: input, shape index: {}]
  %s2 = inlined_call_operand.vmem [shape: f32[1,32], index: 2, kind: input, shape index: {}]
  %s3 = inlined_call_operand.vmem [shape: bf16[32,128], index: 3, kind: input, shape index: {}]
  %s4 = inlined_call_operand.vmem [shape: f32[1,128], index: 4, kind: input, shape index: {}]
  %s5 = inlined_call_operand.vmem [shape: bf16[128,32], index: 5, kind: input, shape index: {}]
  %s6 = inlined_call_operand.vmem [shape: f32[1,32], index: 6, kind: input, shape index: {}]
  %s7 = inlined_call_operand.hbm [shape: f32[16,32], index: 7, kind: output, shape index: {}]
  %s8 = sld [smem:[#allocation0]]
  $region38: #{tpu_custom_call.1} parent=0
    _
  %s10 = ssub.s32 1, %s8
  %s11 = scalar_select 0, %s10, %s8
  $region1: #{tpu_custom_call.1} parent=0
    #allocation2 [shape = 'u8[8192]{0}', space=vmem, size = 0x2000, scoped, tag = 'output window, operand 0, single buffered']
    #allocation3 [shape = 's32[1]{0}', space=sflag, size = 0x4, scoped, tag = 'scoped memory for tpu_custom_call.1']
    %12 = vsyncpa [#allocation3], 0
    // Predicated region
    $region2: #{tpu_custom_call.1} parent=1 // pred_check
      _
    $region3: #{tpu_custom_call.1} parent=1 // pred_check_branch
      %14 = sbr.rel (0) target = $region5
    $region4: #{tpu_custom_call.1} parent=1 // pred_region
      _
    $region5: #{tpu_custom_call.1} parent=1 // pred_fallthru
      _
    // Predicated region
    $region6: #{tpu_custom_call.1} parent=1 // pred_check
      _
    $region7: #{tpu_custom_call.1} parent=1 // pred_check_branch
      %16 = sbr.rel (0) target = $region9
    $region8: #{tpu_custom_call.1} parent=1 // pred_region
      _
    $region9: #{tpu_custom_call.1} parent=1 // pred_fallthru
      _
    // Predicated region
    $region10: #{tpu_custom_call.1} parent=1 // pred_check
      _
    $region11: #{tpu_custom_call.1} parent=1 // pred_check_branch
      %18 = sbr.rel (0) target = $region13
    $region12: #{tpu_custom_call.1} parent=1 // pred_region
      _
    $region13: #{tpu_custom_call.1} parent=1 // pred_fallthru
      _
    // Predicated region
    $region14: #{tpu_custom_call.1} parent=1 // pred_check
      _
    $region15: #{tpu_custom_call.1} parent=1 // pred_check_branch
      %20 = sbr.rel (0) target = $region17
    $region16: #{tpu_custom_call.1} parent=1 // pred_region
      _
    $region17: #{tpu_custom_call.1} parent=1 // pred_fallthru
      _
    // Predicated region
    $region18: #{tpu_custom_call.1} parent=1 // pred_check
      _
    $region19: #{tpu_custom_call.1} parent=1 // pred_check_branch
      %22 = sbr.rel (0) target = $region21
    $region20: #{tpu_custom_call.1} parent=1 // pred_region
      _
    $region21: #{tpu_custom_call.1} parent=1 // pred_fallthru
      _
    // Predicated region
    $region22: #{tpu_custom_call.1} parent=1 // pred_check
      _
    $region23: #{tpu_custom_call.1} parent=1 // pred_check_branch
      %24 = sbr.rel (0) target = $region25
    $region24: #{tpu_custom_call.1} parent=1 // pred_region
      _
    $region25: #{tpu_custom_call.1} parent=1 // pred_fallthru
      _
    // Predicated region
    $region26: #{tpu_custom_call.1} parent=1 // pred_check
      _
    $region27: #{tpu_custom_call.1} parent=1 // pred_check_branch
      %26 = sbr.rel (0) target = $region29
    $region28: #{tpu_custom_call.1} parent=1 // pred_region
      _
    $region29: #{tpu_custom_call.1} parent=1 // pred_fallthru
      _
    %v28 = vld [vmem:[%s0] sm:$0xff]
    %v29 = vld [vmem:[%s0 + $0x8] sm:$0xff]
    %vm30 = vcmask 261120
    %v31 = vsel %vm30, %v28, 0.0
    %32 = vadd.xlane.f32.xlu0 %v31
    %v33 = vpop.xlane.xlu0 %32
    %v34 = vsel %vm30, %v29, 0.0
    %35 = vadd.xlane.f32.xlu0 %v34
    %v36 = vpop.xlane.xlu0 %35
    %v37 = vrcp.pop 32.0
    %v38 = vmul.f32 %v33, %v37
    %v39 = vmul.f32 %v36, %v37
    %v40 = vsub.f32 %v28, %v38
    %v41 = vsub.f32 %v29, %v39
    %v42 = vmul.f32 %v40, %v40
    %v43 = vmul.f32 %v41, %v41
    %v44 = vsel %vm30, %v42, 0.0
    %45 = vadd.xlane.f32.xlu0 %v44
    %v46 = vpop.xlane.xlu0 %45
    %v47 = vsel %vm30, %v43, 0.0
    %48 = vadd.xlane.f32.xlu0 %v47
    %v49 = vpop.xlane.xlu0 %48
    %v50 = vmul.f32 %v46, %v37
    %v51 = vmul.f32 %v49, %v37
    %v52 = vadd.f32 %v50, 1e-12
    %v53 = vadd.f32 %v51, 1e-12
    %v54 = vrsqrt.pop %v52
    %v55 = vrsqrt.pop %v53
    %v56 = vmul.f32 %v40, %v54
    %v57 = vmul.f32 %v41, %v55
    %v58 = vld [vmem:[%s1] sm:$0x1]
    %v60 = vlaneseq
    %v61 = vshrl.u32 %v60, 7
    %v62 = vsub.s32 0, %v61
    %v63 = vrot.slane %v58, %v62
    %v65 = vmul.f32 %v56, %v63
    %v66 = vmul.f32 %v57, %v63
    %v67 = vld [vmem:[%s2] sm:$0x1]
    %v69 = vlaneseq
    %v70 = vshrl.u32 %v69, 7
    %v71 = vsub.s32 0, %v70
    %v72 = vrot.slane %v67, %v71
    %v74 = vadd.f32 %v65, %v72
    %v75 = vadd.f32 %v66, %v72
    %v76 = vpack.c.bf16 %v75, %v74
    %v77 = vld [vmem:[%s3] sm:$0xf]
    %v78 = vld [vmem:[%s3 + $0x4] sm:$0xf]
    %v79 = vld [vmem:[%s3 + $0x8] sm:$0xf]
    %v80 = vld [vmem:[%s3 + $0xc] sm:$0xf]
    %v81 = vld [vmem:[%s4] sm:$0x1]
    %v83 = vlaneseq
    %v84 = vshrl.u32 %v83, 7
    %v85 = vsub.s32 0, %v84
    %v86 = vrot.slane %v81, %v85
    %v92 = vunpack.c.l.b16 %v77
    %v93 = vunpack.c.l.b16 %v78
    %v94 = vunpack.c.l.b16 %v79
    %v95 = vunpack.c.l.b16 %v80
    %v96 = vpack.c.b16 %v93, %v92
    %v97 = vpack.c.b16 %v95, %v94
    %v101 = vsel %vm30, %v76, 0
    %103 = vmatprep.subr.bf16.mxu0 0
    %104 = vmatpush1.bf16.msra.mxu0 0
    %105 = vmatprep.subr.bf16.mxu0 0
    %106 = vmatpush1.bf16.msra.mxu0 0
    %107 = vmatprep.subr.bf16.mxu0 0
    %108 = vmatpush1.bf16.msra.mxu0 0
    %109 = vmatprep.subr.bf16.mxu0 0
    %110 = vmatpush1.bf16.msra.mxu0 0
    %111 = vmatprep.subr.bf16.mxu0 0
    %112 = vmatpush1.bf16.msra.mxu0 0
    %113 = vmatprep.subr.bf16.mxu0 0
    %114 = vmatpush1.bf16.msra.mxu0 0
    %115 = vmatprep.subr.bf16.mxu0 0
    %116 = vmatpush1.bf16.msra.mxu0 %v97
    %117 = vmatprep.subr.bf16.mxu0 0
    %118 = vmatpush1.bf16.msra.mxu0 %v96
    %119 = vmatprep.subr.bf16.mxu0 0
    %120 = vmatpush2.bf16.msra.mxu0 0
    %121 = vmatprep.subr.bf16.mxu0 0
    %122 = vmatpush2.bf16.msra.mxu0 0
    %123 = vmatprep.subr.bf16.mxu0 0
    %124 = vmatpush2.bf16.msra.mxu0 0
    %125 = vmatprep.subr.bf16.mxu0 0
    %126 = vmatpush2.bf16.msra.mxu0 0
    %127 = vmatprep.subr.bf16.mxu0 0
    %128 = vmatpush2.bf16.msra.mxu0 0
    %129 = vmatprep.subr.bf16.mxu0 0
    %130 = vmatpush2.bf16.msra.mxu0 0
    %131 = vmatprep.subr.bf16.mxu0 0
    %132 = vmatpush2.bf16.msra.mxu0 0
    %133 = vmatprep.subr.bf16.mxu0 0
    %134 = vmatpush2.bf16.msra.mxu0 0
    %135 = vmatprep.mubr.bf16.mxu0 0
    %136 = vmatmul.mubr.bf16.gmra.mxu0 %v101
    %v137 = vpop.f32.mrf.mxu0
    %v138 = vadd.f32 %v86, %v137
    %v139 = vpop.f32.mrf.mxu0
    %v140 = vpop.f32.mrf.mxu0
    %v141 = vadd.f32 %v86, %v140
    %v142 = vpop.f32.mrf.mxu0
    %143 = vdwg.mxu0
    %v144 = vmul.f32 %v138, %v138
    %v145 = vmul.f32 %v141, %v141
    %v146 = vmul.f32 %v138, %v144
    %v147 = vmul.f32 %v141, %v145
    %v148 = vmul.f32 %v146, 0.044715
    %v149 = vmul.f32 %v147, 0.044715
    %v150 = vadd.f32 %v138, %v148
    %v151 = vadd.f32 %v141, %v149
    %v152 = vmul.f32 %v150, 0.7978846
    %v153 = vmul.f32 %v151, 0.7978846
    %v154 = vtanh.pop %v152
    %v155 = vtanh.pop %v153
    %v156 = vadd.f32 %v154, 1.0
    %v157 = vadd.f32 %v155, 1.0
    %v158 = vmul.f32 %v156, 0.5
    %v159 = vmul.f32 %v157, 0.5
    %v160 = vmul.f32 %v138, %v158
    %v161 = vmul.f32 %v141, %v159
    %v162 = vpack.c.bf16 %v161, %v160
    %v163 = vld [vmem:[%s5] sm:$0xf]
    %v164 = vld [vmem:[%s5 + $0x4] sm:$0xf]
    %v165 = vld [vmem:[%s5 + $0x8] sm:$0xf]
    %v166 = vld [vmem:[%s5 + $0xc] sm:$0xf]
    %v167 = vld [vmem:[%s5 + $0x10] sm:$0xf]
    %v168 = vld [vmem:[%s5 + $0x14] sm:$0xf]
    %v169 = vld [vmem:[%s5 + $0x18] sm:$0xf]
    %v170 = vld [vmem:[%s5 + $0x1c] sm:$0xf]
    %v171 = vld [vmem:[%s5 + $0x20] sm:$0xf]
    %v172 = vld [vmem:[%s5 + $0x24] sm:$0xf]
    %v173 = vld [vmem:[%s5 + $0x28] sm:$0xf]
    %v174 = vld [vmem:[%s5 + $0x2c] sm:$0xf]
    %v175 = vld [vmem:[%s5 + $0x30] sm:$0xf]
    %v176 = vld [vmem:[%s5 + $0x34] sm:$0xf]
    %v177 = vld [vmem:[%s5 + $0x38] sm:$0xf]
    %v178 = vld [vmem:[%s5 + $0x3c] sm:$0xf]
    %v179 = vld [vmem:[%s6] sm:$0x1]
    %v181 = vlaneseq
    %v182 = vshrl.u32 %v181, 7
    %v183 = vsub.s32 0, %v182
    %v184 = vrot.slane %v179, %v183
    %v202 = vunpack.c.l.b16 %v163
    %v203 = vunpack.c.l.b16 %v164
    %v204 = vunpack.c.l.b16 %v165
    %v205 = vunpack.c.l.b16 %v166
    %v206 = vunpack.c.l.b16 %v167
    %v207 = vunpack.c.l.b16 %v168
    %v208 = vunpack.c.l.b16 %v169
    %v209 = vunpack.c.l.b16 %v170
    %v210 = vunpack.c.l.b16 %v171
    %v211 = vunpack.c.l.b16 %v172
    %v212 = vunpack.c.l.b16 %v173
    %v213 = vunpack.c.l.b16 %v174
    %v214 = vunpack.c.l.b16 %v175
    %v215 = vunpack.c.l.b16 %v176
    %v216 = vunpack.c.l.b16 %v177
    %v217 = vunpack.c.l.b16 %v178
    %v218 = vpack.c.b16 %v203, %v202
    %v219 = vpack.c.b16 %v205, %v204
    %v220 = vpack.c.b16 %v207, %v206
    %v221 = vpack.c.b16 %v209, %v208
    %v222 = vpack.c.b16 %v211, %v210
    %v223 = vpack.c.b16 %v213, %v212
    %v224 = vpack.c.b16 %v215, %v214
    %v225 = vpack.c.b16 %v217, %v216
    %234 = vmatprep.subr.bf16.mxu0 0
    %235 = vmatpush1.bf16.msra.mxu0 %v225
    %236 = vmatprep.subr.bf16.mxu0 0
    %237 = vmatpush1.bf16.msra.mxu0 %v224
    %238 = vmatprep.subr.bf16.mxu0 0
    %239 = vmatpush1.bf16.msra.mxu0 %v223
    %240 = vmatprep.subr.bf16.mxu0 0
    %241 = vmatpush1.bf16.msra.mxu0 %v222
    %242 = vmatprep.subr.bf16.mxu0 0
    %243 = vmatpush1.bf16.msra.mxu0 %v221
    %244 = vmatprep.subr.bf16.mxu0 0
    %245 = vmatpush1.bf16.msra.mxu0 %v220
    %246 = vmatprep.subr.bf16.mxu0 0
    %247 = vmatpush1.bf16.msra.mxu0 %v219
    %248 = vmatprep.subr.bf16.mxu0 0
    %249 = vmatpush1.bf16.msra.mxu0 %v218
    %250 = vmatprep.subr.bf16.mxu0 0
    %251 = vmatpush2.bf16.msra.mxu0 0
    %252 = vmatprep.subr.bf16.mxu0 0
    %253 = vmatpush2.bf16.msra.mxu0 0
    %254 = vmatprep.subr.bf16.mxu0 0
    %255 = vmatpush2.bf16.msra.mxu0 0
    %256 = vmatprep.subr.bf16.mxu0 0
    %257 = vmatpush2.bf16.msra.mxu0 0
    %258 = vmatprep.subr.bf16.mxu0 0
    %259 = vmatpush2.bf16.msra.mxu0 0
    %260 = vmatprep.subr.bf16.mxu0 0
    %261 = vmatpush2.bf16.msra.mxu0 0
    %262 = vmatprep.subr.bf16.mxu0 0
    %263 = vmatpush2.bf16.msra.mxu0 0
    %264 = vmatprep.subr.bf16.mxu0 0
    %265 = vmatpush2.bf16.msra.mxu0 0
    %266 = vmatprep.mubr.bf16.mxu0 0
    %267 = vmatmul.mubr.bf16.gmra.mxu0 %v162
    %v268 = vpop.f32.mrf.mxu0
    %v269 = vadd.f32 %v184, %v268
    %v270 = vpop.f32.mrf.mxu0
    %v271 = vpop.f32.mrf.mxu0
    %v272 = vadd.f32 %v184, %v271
    %v273 = vpop.f32.mrf.mxu0
    %274 = vdwg.mxu0
    %v275 = vadd.f32 %v269, %v28
    %v276 = vadd.f32 %v272, %v29
    %277 = vst.msk [vmem:[#allocation2] sm:$0xff] %vm30, %v275
    %278 = vst.msk [vmem:[#allocation2 + $0x8] sm:$0xff] %vm30, %v276
    // Predicated region
    $region30: #{tpu_custom_call.1} parent=1 // pred_check
      _
    $region31: #{tpu_custom_call.1} parent=1 // pred_check_branch
      %280 = sbr.rel (0) target = $region33
    $region32: #{tpu_custom_call.1} parent=1 // pred_region
      %s282 = ssub.s32 256, 256
      %283 = vsyncadd [#allocation3], %s282
      %s284 = sshll.u32 [#allocation2], 4
      %s285 = int_to_ptr.vmem [resolvable:$true] %s284
      %290 = dma.vmem_to_hbm [thread:$0]  %s285, 256, %s7, [#allocation3], 128, 128, 8
    $region33: #{tpu_custom_call.1} parent=1 // pred_fallthru
      _
    // Predicated region
    $region34: #{tpu_custom_call.1} parent=1 // pred_check
      _
    $region35: #{tpu_custom_call.1} parent=1 // pred_check_branch
      %292 = sbr.rel (0) target = $region37
    $region36: #{tpu_custom_call.1} parent=1 // pred_region
      %293 = dma.done [#allocation3], 256
    $region37: #{tpu_custom_call.1} parent=1 // pred_fallthru
      _
    %294 = vsyncpa [#allocation3], 1

</llo_original>
